<compile_context>
chip_gen: v7x
topology: tpu7x:2x2x1
jax: 0.10.0
libtpu: 0.0.40
codegen_flags: <defaults>
</compile_context>

<pallas_src>
import jax
import jax.numpy as jnp
import numpy as np
from jax.experimental import pallas as pl
from jax.experimental.pallas import tpu as pltpu


# ----------------------------------------------------------------------------
# One-time host-side parameter fold (float64 on host, cast to f32 at the end).
# Valid because the Critic has no nonlinearities between its Linear layers.
# ----------------------------------------------------------------------------
def fold_critic_params(params, fc_layer_number, n_tokens):
    """Collapse the all-linear Critic into (A, c, d) with
    value[b] = <x[b], A> + <r[b], c> + d."""
    w_emb = np.asarray(params["w_emb"], dtype=np.float64)   # (F, E)
    b_emb = np.asarray(params["b_emb"], dtype=np.float64)   # (1, E)
    fc_w = [np.asarray(w, dtype=np.float64) for w in params["fc_w"]]
    fc_b = [np.asarray(b, dtype=np.float64) for b in params["fc_b"]]
    w_out = np.asarray(params["w_out"], dtype=np.float64)   # (N*H, 1)
    b_out = np.asarray(params["b_out"], dtype=np.float64)   # (1, 1)

    F, E = w_emb.shape
    w0 = fc_w[0]
    w0a = w0[:E, :]          # acts on the embedding features
    w0b = w0[E:E + 1, :]     # acts on the concatenated reward feature

    # Per-token affine map: h_last = x @ M + r * m_r + m_b
    M = 1000000.0 * (w_emb @ w0a)                 # (F, H0)
    m_r = w0b                                     # (1, H0)
    m_b = b_emb @ w0a + fc_b[0]                   # (1, H0)
    for layer in range(1, fc_layer_number):
        W = fc_w[layer]
        M = M @ W
        m_r = m_r @ W
        m_b = m_b @ W + fc_b[layer]

    H = M.shape[1]
    wout_tok = w_out.reshape(n_tokens, H)         # row-major == nn.Flatten()

    A = wout_tok @ M.T                            # (N, F)
    c = wout_tok @ m_r.T                          # (N, 1)
    d = float(np.sum(wout_tok * m_b) + b_out[0, 0])

    return {
        "a_flat": jnp.asarray(A.reshape(1, n_tokens * F), jnp.float32),  # (1, N*F)
        "c_row": jnp.asarray(c.reshape(1, n_tokens), jnp.float32),       # (1, N)
        "d": jnp.full((1, 1), d, jnp.float32),                           # (1, 1) SMEM
    }


# ----------------------------------------------------------------------------
# Kernel: per batch tile, weighted sums on the VPU + lane reductions (XLU).
# ----------------------------------------------------------------------------
def _critic_kernel(x_ref, r_ref, a_ref, c_ref, d_ref, out_ref):
    # x_ref: (TB, N*F)  r_ref: (TB, N)   [source dtype, cast here]
    # a_ref: (1, N*F)   c_ref: (1, N)    [resident f32 VMEM]
    # d_ref: (1, 1) SMEM                 out_ref: (TB, 1)
    x = x_ref[...].astype(jnp.float32)                  # in-kernel upcast (no-op for f32)
    r = r_ref[...].astype(jnp.float32)
    sx = jnp.sum(x * a_ref[...], axis=-1, keepdims=True)   # VPU mul + XLU lane reduce
    sr = jnp.sum(r * c_ref[...], axis=-1, keepdims=True)
    out_ref[...] = sx + sr + d_ref[0, 0]


def _pick_block_b(batch_padded, nf, n_tokens, itemsize_x, itemsize_r,
                  vmem_budget_bytes=16 << 20, min_grid_steps=2):
    """Largest multiple-of-8 batch tile that divides the padded batch, keeps
    the double-buffered input blocks inside `vmem_budget_bytes`, and leaves
    at least `min_grid_steps` grid steps (so v7x's two TensorCores both get
    work) whenever the padded batch allows it."""
    assert batch_padded % 8 == 0
    bytes_per_row = nf * itemsize_x + n_tokens * itemsize_r + 4
    cap_rows = max(8, (vmem_budget_bytes // (2 * bytes_per_row) // 8) * 8)
    # Guarantee >= min_grid_steps grid steps when possible (v7x megacore).
    max_rows_for_steps = batch_padded // min_grid_steps
    if max_rows_for_steps >= 8:
        cap_rows = min(cap_rows, (max_rows_for_steps // 8) * 8)
    tb = min(batch_padded, cap_rows)
    tb = max(8, (tb // 8) * 8)
    while batch_padded % tb:
        tb -= 8
    return tb


def critic_forward(channel_matrix, reward_array, folded, *, block_b=None,
                   vmem_budget_bytes=16 << 20):
    """channel_matrix: (B, N, F), reward_array: (B, N, 1) -> value (B, 1)."""
    B, N, F = channel_matrix.shape
    NF = N * F

    # Row-major flattens (no data movement); keep the source dtype and let the
    # kernel upcast, so sub-f32 activations stream at native width.
    x2 = channel_matrix.reshape(B, NF)
    r2 = reward_array.reshape(B, N)

    # Pad the batch to a multiple of 8 sublanes so the streaming pipeline and
    # megacore sharding always apply; padded rows are throwaway work.
    B_pad = ((B + 7) // 8) * 8
    if B_pad != B:
        x2 = jnp.pad(x2, ((0, B_pad - B), (0, 0)))
        r2 = jnp.pad(r2, ((0, B_pad - B), (0, 0)))

    itemsize_x = jnp.dtype(x2.dtype).itemsize
    itemsize_r = jnp.dtype(r2.dtype).itemsize
    if block_b is None:
        block_b = _pick_block_b(B_pad, NF, N, itemsize_x, itemsize_r,
                                vmem_budget_bytes)
    assert B_pad % block_b == 0 and block_b % 8 == 0, (B_pad, block_b)

    grid = (B_pad // block_b,)

    # Explicit scoped-VMEM limit with headroom (double-buffered inputs/outputs
    # + resident folded weights); capped safely below v7x's 64 MiB.
    vmem_needed = (2 * block_b * NF * itemsize_x
                   + 2 * block_b * N * itemsize_r
                   + 2 * block_b * 4
                   + (NF + N + 128) * 4)
    vmem_limit = int(min(max(vmem_needed + (8 << 20), 32 << 20), 48 << 20))

    cost = pl.CostEstimate(
        flops=2 * B_pad * (NF + N),
        transcendentals=0,
        bytes_accessed=B_pad * (NF * itemsize_x + N * itemsize_r + 4)
                       + (NF + N + 1) * 4,
    )

    out = pl.pallas_call(
        _critic_kernel,
        out_shape=jax.ShapeDtypeStruct((B_pad, 1), jnp.float32),
        grid=grid,
        in_specs=[
            pl.BlockSpec((block_b, NF), lambda b: (b, 0)),            # x tile (streamed)
            pl.BlockSpec((block_b, N), lambda b: (b, 0)),             # reward tile
            pl.BlockSpec(memory_space=pltpu.MemorySpace.VMEM),        # folded A, resident
            pl.BlockSpec(memory_space=pltpu.MemorySpace.VMEM),        # folded c, resident
            pl.BlockSpec(memory_space=pltpu.MemorySpace.SMEM),        # scalar d
        ],
        out_specs=pl.BlockSpec((block_b, 1), lambda b: (b, 0)),
        compiler_params=pltpu.CompilerParams(
            dimension_semantics=("parallel",),                        # megacore on v7x
            vmem_limit_bytes=vmem_limit,
        ),
        cost_estimate=cost,
    )(x2, r2, folded["a_flat"], folded["c_row"], folded["d"])

    return out[:B]


# ----------------------------------------------------------------------------
# Layer-by-layer reference (mirrors the PyTorch module exactly).
# ----------------------------------------------------------------------------
def _reference_forward(channel_matrix, reward_array, params, fc_layer_number):
    x = 1000000.0 * channel_matrix
    emb = jnp.einsum("bnf,fe->bne", x, params["w_emb"]) + params["b_emb"][0]
    h = jnp.concatenate([emb, reward_array], axis=2)
    for layer in range(fc_layer_number):
        h = jnp.einsum("bni,io->bno", h, params["fc_w"][layer]) + params["fc_b"][layer][0]
    flat = h.reshape(h.shape[0], -1)
    return flat @ params["w_out"] + params["b_out"][0]


def _init_linear(key, fan_in, fan_out):
    # Deterministic init mimicking torch.nn.Linear default (uniform +/- 1/sqrt(fan_in)).
    kw, kb = jax.random.split(key)
    bound = 1.0 / jnp.sqrt(jnp.float32(fan_in))
    w = jax.random.uniform(kw, (fan_in, fan_out), jnp.float32, -bound, bound)
    b = jax.random.uniform(kb, (1, fan_out), jnp.float32, -bound, bound)
    return w, b


if __name__ == "__main__":
    # "args" for the Critic, at small shapes.
    batch = 16
    user_antennas = 2
    user_numbers = 4
    N = user_antennas * user_numbers          # tokens per sample
    flatten_dim = 16                          # N * flatten_dim = 128 lanes
    embedding_dim = 32
    fc_layer_number = 2
    hidden_dim = [64, 32]

    key = jax.random.PRNGKey(0)
    k_emb, k_fc, k_out, k_ch, k_rw = jax.random.split(key, 5)

    # Parameters (deterministic, in-script).
    w_emb, b_emb = _init_linear(k_emb, flatten_dim, embedding_dim)
    fc_w, fc_b = [], []
    in_dim = embedding_dim + 1
    fc_keys = jax.random.split(k_fc, fc_layer_number)
    for layer in range(fc_layer_number):
        w, b = _init_linear(fc_keys[layer], in_dim, hidden_dim[layer])
        fc_w.append(w)
        fc_b.append(b)
        in_dim = hidden_dim[layer]
    w_out, b_out = _init_linear(k_out, in_dim * N, 1)

    params = {"w_emb": w_emb, "b_emb": b_emb,
              "fc_w": fc_w, "fc_b": fc_b,
              "w_out": w_out, "b_out": b_out}

    # Inputs: channel entries are tiny (the forward rescales by 1e6).
    channel_matrix = jax.random.normal(k_ch, (batch, N, flatten_dim), jnp.float32) * 1e-6
    reward_array = jax.random.normal(k_rw, (batch, N, 1), jnp.float32)

    # One-time parameter fold, then the gridded Pallas forward.
    folded = fold_critic_params(params, fc_layer_number, N)

    # Test 1: batch=16 -> heuristic picks block_b=8, grid=(2,) (both v7x TCs busy).
    value = critic_forward(channel_matrix, reward_array, folded)
    value = jax.block_until_ready(value)
    ref = _reference_forward(channel_matrix, reward_array, params, fc_layer_number)
    assert value.shape == (batch, 1)
    assert jnp.allclose(value, ref, rtol=1e-4, atol=1e-4), (value, ref)

    # Test 2: non-multiple-of-8 batch exercises the padding + output-slice path.
    b2 = 13
    value2 = critic_forward(channel_matrix[:b2], reward_array[:b2], folded)
    value2 = jax.block_until_ready(value2)
    ref2 = _reference_forward(channel_matrix[:b2], reward_array[:b2],
                              params, fc_layer_number)
    assert value2.shape == (b2, 1)
    assert jnp.allclose(value2, ref2, rtol=1e-4, atol=1e-4), (value2, ref2)

    print("KERNEL_OK")
</pallas_src>

<mosaic_0001>
module attributes {stable_mosaic.version = 11 : i64} {
  func.func @_critic_kernel(%arg0: i32, %arg1: memref<8x128xf32, #tpu.memory_space<vmem>>, %arg2: memref<8x8xf32, #tpu.memory_space<vmem>>, %arg3: memref<1x128xf32, #tpu.memory_space<vmem>>, %arg4: memref<1x8xf32, #tpu.memory_space<vmem>>, %arg5: memref<1x1xf32, #tpu.memory_space<smem>>, %arg6: memref<8x1xf32, #tpu.memory_space<vmem>>) attributes {dimension_semantics = [#tpu.dimension_semantics<parallel>], iteration_bounds = array<i64: 2>, scalar_prefetch = 0 : i64, scratch_operands = 0 : i64, tpu.core_type = #tpu.core_type<tc>, window_params = [{transform_indices = @transform_0, window_bounds = array<i64: 8, 128>}, {transform_indices = @transform_1, window_bounds = array<i64: 8, 8>}, {pipeline_mode = #tpu.pipeline_mode<synchronous>, transform_indices = @transform_2, window_bounds = array<i64: 1, 128>}, {pipeline_mode = #tpu.pipeline_mode<synchronous>, transform_indices = @transform_3, window_bounds = array<i64: 1, 8>}, {transform_indices = @transform_4, window_bounds = array<i64: 1, 1>}, {transform_indices = @transform_5, window_bounds = array<i64: 8, 1>}]} {
    %c0 = arith.constant 0 : index
    %c0_0 = arith.constant 0 : index
    %0 = vector.load %arg1[%c0, %c0_0] : memref<8x128xf32, #tpu.memory_space<vmem>>, vector<8x128xf32>
    %c0_1 = arith.constant 0 : index
    %c0_2 = arith.constant 0 : index
    %1 = vector.load %arg2[%c0_1, %c0_2] : memref<8x8xf32, #tpu.memory_space<vmem>>, vector<8x8xf32>
    %c0_3 = arith.constant 0 : index
    %c0_4 = arith.constant 0 : index
    %2 = vector.load %arg3[%c0_3, %c0_4] : memref<1x128xf32, #tpu.memory_space<vmem>>, vector<1x128xf32>
    %3 = vector.broadcast %2 : vector<1x128xf32> to vector<8x128xf32>
    %4 = arith.mulf %0, %3 : vector<8x128xf32>
    %cst = arith.constant dense<0.000000e+00> : vector<8xf32>
    %5 = vector.multi_reduction <add>, %4, %cst [1] : vector<8x128xf32> to vector<8xf32>
    %6 = vector.shape_cast %5 : vector<8xf32> to vector<8x1xf32>
    %c0_5 = arith.constant 0 : index
    %c0_6 = arith.constant 0 : index
    %7 = vector.load %arg4[%c0_5, %c0_6] : memref<1x8xf32, #tpu.memory_space<vmem>>, vector<1x8xf32>
    %8 = vector.broadcast %7 : vector<1x8xf32> to vector<8x8xf32>
    %9 = arith.mulf %1, %8 : vector<8x8xf32>
    %cst_7 = arith.constant dense<0.000000e+00> : vector<8xf32>
    %10 = vector.multi_reduction <add>, %9, %cst_7 [1] : vector<8x8xf32> to vector<8xf32>
    %11 = vector.shape_cast %10 : vector<8xf32> to vector<8x1xf32>
    %12 = arith.addf %6, %11 : vector<8x1xf32>
    %c0_8 = arith.constant 0 : index
    %c0_9 = arith.constant 0 : index
    %13 = memref.load %arg5[%c0_8, %c0_9] : memref<1x1xf32, #tpu.memory_space<smem>>
    %14 = vector.broadcast %13 : f32 to vector<8x1xf32>
    %15 = arith.addf %12, %14 : vector<8x1xf32>
    %c0_10 = arith.constant 0 : index
    %c0_11 = arith.constant 0 : index
    %16 = vector.load %arg6[%c0_10, %c0_11] : memref<8x1xf32, #tpu.memory_space<vmem>>, vector<8x1xf32>
    tpu.vector_store %arg6[%c0_10, %c0_11], %15 {strides = array<i32>} : memref<8x1xf32, #tpu.memory_space<vmem>>, vector<8x1xf32>,
    return
  }
  func.func @transform_0(%arg0: i32) -> (i32, i32) {
    %c0_i32 = arith.constant 0 : i32
    %c0_i32_0 = arith.constant 0 : i32
    return %arg0, %c0_i32 : i32, i32
  }
  func.func @transform_1(%arg0: i32) -> (i32, i32) {
    %c0_i32 = arith.constant 0 : i32
    %c0_i32_0 = arith.constant 0 : i32
    return %arg0, %c0_i32 : i32, i32
  }
  func.func @transform_2(%arg0: i32) -> (i32, i32) {
    %c0_i32 = arith.constant 0 : i32
    %c0_i32_0 = arith.constant 0 : i32
    %c0_i32_1 = arith.constant 0 : i32
    return %c0_i32, %c0_i32_0 : i32, i32
  }
  func.func @transform_3(%arg0: i32) -> (i32, i32) {
    %c0_i32 = arith.constant 0 : i32
    %c0_i32_0 = arith.constant 0 : i32
    %c0_i32_1 = arith.constant 0 : i32
    return %c0_i32, %c0_i32_0 : i32, i32
  }
  func.func @transform_4(%arg0: i32) -> (i32, i32) {
    %c0_i32 = arith.constant 0 : i32
    %c0_i32_0 = arith.constant 0 : i32
    %c0_i32_1 = arith.constant 0 : i32
    return %c0_i32, %c0_i32_0 : i32, i32
  }
  func.func @transform_5(%arg0: i32) -> (i32, i32) {
    %c0_i32 = arith.constant 0 : i32
    %c0_i32_0 = arith.constant 0 : i32
    return %arg0, %c0_i32 : i32, i32
  }
}

</mosaic_0001>

<llo_original>
// kernel: tpu_custom_call.1
$region0: #{tpu_custom_call.1}
  #allocation0 [shape = 'u32[]', space=smem, size = 0x4, offset = 0x4, fixed_abs, tag = 'smem constant byte address 0x4 - core index']
  #allocation1 [shape = 'u32[144,128]{1,0:T(1,128)}', space=vmem, size = 0x12000, scoped, tag = 'internal scratch']
  #allocation2 [shape = 'f32[1,1]{1,0:T(1,128)S(6)}', space=smem, size = 0x200, scoped, tag = 'scoped memory for tpu_custom_call.1']
  %s0 = inlined_call_operand.vmem [shape: f32[16,128], index: 0, kind: input, shape index: {}]
  %s1 = inlined_call_operand.vmem [shape: f32[16,8], index: 1, kind: input, shape index: {}]
  %s2 = inlined_call_operand.vmem [shape: f32[1,128], index: 2, kind: input, shape index: {}]
  %s3 = inlined_call_operand.vmem [shape: f32[1,8], index: 3, kind: input, shape index: {}]
  %s4 = inlined_call_operand.<no memory space> [shape: f32[1,1], index: 4, kind: input, shape index: {}]
  %s5 = inlined_call_operand.vmem [shape: f32[16,1], index: 5, kind: output, shape index: {}]
  %s6 = sld [smem:[#allocation0]]
  $region53: #{tpu_custom_call.1} parent=0
    _
  %s8 = ssub.s32 1, %s6
  %s9 = scalar_select 0, %s8, %s6
  %10 = sst [smem:[#allocation2]] %s4
  loop: start=0, step=1, limit=4
  $region2: #{tpu_custom_call.1} parent=0 // loop_pre_header
    _
  $region3: #{tpu_custom_call.1} parent=0 // loop_header
    %s12 = sphi 0, %s16
    %p13 = scmp.ge.s32.totalorder %s12, 4
    %s22 = sphi 0, %s24
    %s25 = sphi 0, %s22
    %s26 = sphi 0, %s25
    %s42 = sphi 0, %s26
    %s48 = sphi 0, %s50
    %s51 = sphi 0, %s48
    %s52 = sphi 0, %s51
    %s68 = sphi 0, %s52
    %s72 = sphi 0, %s72
    %s74 = sphi 0, %s72
    %s75 = sphi 0, %s74
    %s89 = sphi 0, %s75
    %s93 = sphi 0, %s93
    %s95 = sphi 0, %s93
    %s96 = sphi 0, %s95
    %s110 = sphi 0, %s96
    %s114 = sphi 0, %s114
    %s116 = sphi 0, %s114
    %s117 = sphi 0, %s116
    %s131 = sphi 0, %s117
    %s137 = sphi 0, %s139
    %s140 = sphi 0, %s137
    %s141 = sphi 0, %s140
    %s157 = sphi 0, %s141
  $region4: #{tpu_custom_call.1} parent=0 // loop_header_branch
    %15 = sbr.rel (%p13) target = $region8
  $region5: #{tpu_custom_call.1} parent=0 // loop_body
    %s17 = ssub.s32 %s12, 1
    %s18 = ssub.s32 %s12, 2
    %s19 = sadd.s32 %s12, 1
    %s20 = ssub.s32 %s12, %s19
    %p21 = scmp.eq.s32.totalorder %s20, 0
    %s23 = sadd.s32 %s22, 1
    %s24 = scalar_select %p21, %s22, %s23
    %p27 = pneg %p21
    %p28 = scmp.eq.s32.totalorder %s12, 1
    %p29 = por %p27, %p28
    %p30 = scmp.ne.s32.totalorder %s22, %s25
    %p31 = scmp.eq.s32.totalorder %s12, 0
    %p32 = por %p30, %p31
    %p33 = scmp.ne.s32.totalorder %s22, %s25
    %p34 = scmp.eq.s32.totalorder %s17, 1
    %p35 = por %p33, %p34
    %p36 = scmp.ne.s32.totalorder %s25, %s26
    %p37 = scmp.eq.s32.totalorder %s17, 0
    %p38 = por %p36, %p37
    %p39 = scmp.ne.s32.totalorder %s25, %s26
    %p40 = scmp.eq.s32.totalorder %s18, 1
    %p41 = por %p39, %p40
    %p43 = scmp.ne.s32.totalorder %s26, %s42
    %p44 = scmp.eq.s32.totalorder %s18, 0
    %p45 = por %p43, %p44
    %s46 = ssub.s32 %s12, %s19
    %p47 = scmp.eq.s32.totalorder %s46, 0
    %s49 = sadd.s32 %s48, 1
    %s50 = scalar_select %p47, %s48, %s49
    %p53 = pneg %p47
    %p54 = scmp.eq.s32.totalorder %s12, 1
    %p55 = por %p53, %p54
    %p56 = scmp.ne.s32.totalorder %s48, %s51
    %p57 = scmp.eq.s32.totalorder %s12, 0
    %p58 = por %p56, %p57
    %p59 = scmp.ne.s32.totalorder %s48, %s51
    %p60 = scmp.eq.s32.totalorder %s17, 1
    %p61 = por %p59, %p60
    %p62 = scmp.ne.s32.totalorder %s51, %s52
    %p63 = scmp.eq.s32.totalorder %s17, 0
    %p64 = por %p62, %p63
    %p65 = scmp.ne.s32.totalorder %s51, %s52
    %p66 = scmp.eq.s32.totalorder %s18, 1
    %p67 = por %p65, %p66
    %p69 = scmp.ne.s32.totalorder %s52, %s68
    %p70 = scmp.eq.s32.totalorder %s18, 0
    %p71 = por %p69, %p70
    %s73 = sadd.s32 %s72, 1
    %p76 = scmp.eq.s32.totalorder %s12, 1
    %p77 = scmp.ne.s32.totalorder %s72, %s74
    %p78 = scmp.eq.s32.totalorder %s12, 0
    %p79 = por %p77, %p78
    %p80 = scmp.ne.s32.totalorder %s72, %s74
    %p81 = scmp.eq.s32.totalorder %s17, 1
    %p82 = por %p80, %p81
    %p83 = scmp.ne.s32.totalorder %s74, %s75
    %p84 = scmp.eq.s32.totalorder %s17, 0
    %p85 = por %p83, %p84
    %p86 = scmp.ne.s32.totalorder %s74, %s75
    %p87 = scmp.eq.s32.totalorder %s18, 1
    %p88 = por %p86, %p87
    %p90 = scmp.ne.s32.totalorder %s75, %s89
    %p91 = scmp.eq.s32.totalorder %s18, 0
    %p92 = por %p90, %p91
    %s94 = sadd.s32 %s93, 1
    %p97 = scmp.eq.s32.totalorder %s12, 1
    %p98 = scmp.ne.s32.totalorder %s93, %s95
    %p99 = scmp.eq.s32.totalorder %s12, 0
    %p100 = por %p98, %p99
    %p101 = scmp.ne.s32.totalorder %s93, %s95
    %p102 = scmp.eq.s32.totalorder %s17, 1
    %p103 = por %p101, %p102
    %p104 = scmp.ne.s32.totalorder %s95, %s96
    %p105 = scmp.eq.s32.totalorder %s17, 0
    %p106 = por %p104, %p105
    %p107 = scmp.ne.s32.totalorder %s95, %s96
    %p108 = scmp.eq.s32.totalorder %s18, 1
    %p109 = por %p107, %p108
    %p111 = scmp.ne.s32.totalorder %s96, %s110
    %p112 = scmp.eq.s32.totalorder %s18, 0
    %p113 = por %p111, %p112
    %s115 = sadd.s32 %s114, 1
    %p118 = scmp.eq.s32.totalorder %s12, 1
    %p119 = scmp.ne.s32.totalorder %s114, %s116
    %p120 = scmp.eq.s32.totalorder %s12, 0
    %p121 = por %p119, %p120
    %p122 = scmp.ne.s32.totalorder %s114, %s116
    %p123 = scmp.eq.s32.totalorder %s17, 1
    %p124 = por %p122, %p123
    %p125 = scmp.ne.s32.totalorder %s116, %s117
    %p126 = scmp.eq.s32.totalorder %s17, 0
    %p127 = por %p125, %p126
    %p128 = scmp.ne.s32.totalorder %s116, %s117
    %p129 = scmp.eq.s32.totalorder %s18, 1
    %p130 = por %p128, %p129
    %p132 = scmp.ne.s32.totalorder %s117, %s131
    %p133 = scmp.eq.s32.totalorder %s18, 0
    %p134 = por %p132, %p133
    %s135 = ssub.s32 %s12, %s19
    %p136 = scmp.eq.s32.totalorder %s135, 0
    %s138 = sadd.s32 %s137, 1
    %s139 = scalar_select %p136, %s137, %s138
    %p142 = pneg %p136
    %p143 = scmp.eq.s32.totalorder %s12, 1
    %p144 = por %p142, %p143
    %p145 = scmp.ne.s32.totalorder %s137, %s140
    %p146 = scmp.eq.s32.totalorder %s12, 0
    %p147 = por %p145, %p146
    %p148 = scmp.ne.s32.totalorder %s137, %s140
    %p149 = scmp.eq.s32.totalorder %s17, 1
    %p150 = por %p148, %p149
    %p151 = scmp.ne.s32.totalorder %s140, %s141
    %p152 = scmp.eq.s32.totalorder %s17, 0
    %p153 = por %p151, %p152
    %p154 = scmp.ne.s32.totalorder %s140, %s141
    %p155 = scmp.eq.s32.totalorder %s18, 1
    %p156 = por %p154, %p155
    %p158 = scmp.ne.s32.totalorder %s141, %s157
    %p159 = scmp.eq.s32.totalorder %s18, 0
    %p160 = por %p158, %p159
    %p161 = scmp.le.s32.totalorder 1, %s12
    %p162 = scmp.lt.s32.totalorder %s12, 3
    %p163 = pnand %p161, %p162
    %p164 = pneg %p163
    // Predicated region
    $region9: #{tpu_custom_call.1} parent=5 // pred_check
      _
    $region10: #{tpu_custom_call.1} parent=5 // pred_check_branch
      %166 = sbr.rel (%p163) target = $region12
    $region11: #{tpu_custom_call.1} parent=5 // pred_region
      %s167 = ssub.s32 %s12, 1
      // Predicated region
      $region13: #{tpu_custom_call.1} parent=11 // pred_check
        %p168 = pneg %p85
      $region14: #{tpu_custom_call.1} parent=11 // pred_check_branch
        %170 = sbr.rel (%p168) target = $region16
      $region15: #{tpu_custom_call.1} parent=11 // pred_region
        _
      $region16: #{tpu_custom_call.1} parent=11 // pred_fallthru
        _
      // Predicated region
      $region17: #{tpu_custom_call.1} parent=11 // pred_check
        %p171 = pneg %p106
      $region18: #{tpu_custom_call.1} parent=11 // pred_check_branch
        %173 = sbr.rel (%p171) target = $region20
      $region19: #{tpu_custom_call.1} parent=11 // pred_region
        _
      $region20: #{tpu_custom_call.1} parent=11 // pred_fallthru
        _
      // Predicated region
      $region21: #{tpu_custom_call.1} parent=11 // pred_check
        %p174 = pneg %p127
      $region22: #{tpu_custom_call.1} parent=11 // pred_check_branch
        %176 = sbr.rel (%p174) target = $region24
      $region23: #{tpu_custom_call.1} parent=11 // pred_region
        _
      $region24: #{tpu_custom_call.1} parent=11 // pred_fallthru
        _
    $region12: #{tpu_custom_call.1} parent=5 // pred_fallthru
      _
    %p177 = scmp.lt.s32.totalorder %s12, 2
    // Predicated region
    $region25: #{tpu_custom_call.1} parent=5 // pred_check
      %p178 = pneg %p177
    $region26: #{tpu_custom_call.1} parent=5 // pred_check_branch
      %180 = sbr.rel (%p178) target = $region28
    $region27: #{tpu_custom_call.1} parent=5 // pred_region
      // Predicated region
      $region29: #{tpu_custom_call.1} parent=27 // pred_check
        %p181 = pneg %p32
      $region30: #{tpu_custom_call.1} parent=27 // pred_check_branch
        %183 = sbr.rel (%p181) target = $region32
      $region31: #{tpu_custom_call.1} parent=27 // pred_region
        %p184 = scmp.lt.s32.totalorder %s12, 1
        %s185 = scalar_select %p184, %s12, 1
        %s186 = smul.addr %s185, 8
        %s187 = scalar_lea.vmem %s0, %s186
      $region32: #{tpu_custom_call.1} parent=27 // pred_fallthru
        _
      // Predicated region
      $region33: #{tpu_custom_call.1} parent=27 // pred_check
        %p188 = pneg %p58
      $region34: #{tpu_custom_call.1} parent=27 // pred_check_branch
        %190 = sbr.rel (%p188) target = $region36
      $region35: #{tpu_custom_call.1} parent=27 // pred_region
        %p191 = scmp.lt.s32.totalorder %s12, 1
        %s192 = scalar_select %p191, %s12, 1
        %s193 = smul.addr %s192, 8
        %s194 = scalar_lea.vmem %s1, %s193
      $region36: #{tpu_custom_call.1} parent=27 // pred_fallthru
        _
    $region28: #{tpu_custom_call.1} parent=5 // pred_fallthru
      _
    %p195 = scmp.le.s32.totalorder 1, %s12
    %p196 = scmp.lt.s32.totalorder %s12, 3
    %p197 = pnand %p195, %p196
    %p198 = pneg %p197
    // Predicated region
    $region37: #{tpu_custom_call.1} parent=5 // pred_check
      _
    $region38: #{tpu_custom_call.1} parent=5 // pred_check_branch
      %200 = sbr.rel (%p197) target = $region40
    $region39: #{tpu_custom_call.1} parent=5 // pred_region
      %s201 = ssub.s32 %s12, 1
      %p202 = scmp.lt.s32.totalorder %s17, 1
      %s203 = scalar_select %p202, %s17, 1
      %s204 = smul.addr %s203, 8
      %s205 = scalar_lea.vmem %s0, %s204
      %p206 = pneg %p38
      %p207 = pneg %p35
      %p208 = scmp.lt.s32.totalorder %s17, 1
      %s209 = scalar_select %p208, %s17, 1
      %s210 = smul.addr %s209, 8
      %s211 = scalar_lea.vmem %s1, %s210
      %p212 = pneg %p64
      %p213 = pneg %p61
      %p214 = pneg %p85
      %p215 = pneg %p82
      %p216 = pneg %p106
      %p217 = pneg %p103
      %p218 = pneg %p127
      %p219 = pneg %p124
      %p220 = pneg %p153
      %p221 = pneg %p150
      %p222 = scmp.lt.s32.totalorder %s17, 1
      %s223 = scalar_select %p222, %s17, 1
      %s224 = smul.addr %s223, 8
      %s225 = scalar_lea.vmem %s5, %s224
      %p226 = scmp.lt.s32.totalorder %s17, 1
      %s227 = scalar_select %p226, %s17, 1
      %s228 = smul.addr %s227, 8
      %s229 = scalar_lea.vmem %s0, %s228
      %p230 = scmp.lt.s32.totalorder %s17, 1
      %s231 = scalar_select %p230, %s17, 1
      %s232 = smul.addr %s231, 8
      %s233 = scalar_lea.vmem %s1, %s232
      %p234 = scmp.lt.s32.totalorder %s17, 1
      %s235 = scalar_select %p234, %s17, 1
      %s236 = smul.addr %s235, 8
      %s237 = scalar_lea.vmem %s5, %s236
      %v238 = vld [vmem:[%s229] sm:$0xff]
      %v239 = vld [vmem:[%s233] sm:$0xff]
      %v240 = vld [vmem:[%s2] sm:$0x1]
      %v242 = vlaneseq
      %v243 = vshrl.u32 %v242, 7
      %v244 = vsub.s32 0, %v243
      %v245 = vrot.slane %v240, %v244
      %v247 = vmul.f32 %v238, %v245
      %248 = vadd.xlane.f32.xlu0 %v247
      %v249 = vpop.xlane.xlu0 %248
      %v250 = vld [vmem:[%s3] sm:$0x1]
      %v252 = vlaneseq
      %v253 = vshrl.u32 %v252, 7
      %v254 = vsub.s32 0, %v253
      %v255 = vrot.slane %v250, %v254
      %v257 = vmul.f32 %v239, %v255
      %vm258 = vcmask 64512
      %v259 = vsel %vm258, %v257, 0.0
      %260 = vadd.xlane.f32.xlu0 %v259
      %v261 = vpop.xlane.xlu0 %260
      %v262 = vadd.f32 %v249, %v261
      %s263 = sld [smem:[#allocation2]]
      %v264 = vstv %s263
      %v265 = vadd.f32 %v262, %v264
      %vm266 = vcmask 7168
      %267 = vst.msk [vmem:[%s237] sm:$0xff] %vm266, %v265
      %p268 = scmp.lt.s32.totalorder %s17, 1
      %s269 = scalar_select %p268, %s17, 1
      %s270 = smul.addr %s269, 8
      %s271 = scalar_lea.vmem %s5, %s270
      // Predicated region
      $region41: #{tpu_custom_call.1} parent=39 // pred_check
        %p272 = pneg %p150
      $region42: #{tpu_custom_call.1} parent=39 // pred_check_branch
        %274 = sbr.rel (%p272) target = $region44
      $region43: #{tpu_custom_call.1} parent=39 // pred_region
        _
      $region44: #{tpu_custom_call.1} parent=39 // pred_fallthru
        _
    $region40: #{tpu_custom_call.1} parent=5 // pred_fallthru
      _
    %p275 = scmp.le.s32.totalorder 2, %s12
    // Predicated region
    $region45: #{tpu_custom_call.1} parent=5 // pred_check
      %p276 = pneg %p275
    $region46: #{tpu_custom_call.1} parent=5 // pred_check_branch
      %278 = sbr.rel (%p276) target = $region48
    $region47: #{tpu_custom_call.1} parent=5 // pred_region
      %s279 = ssub.s32 %s12, 2
      // Predicated region
      $region49: #{tpu_custom_call.1} parent=47 // pred_check
        %p280 = pneg %p156
      $region50: #{tpu_custom_call.1} parent=47 // pred_check_branch
        %282 = sbr.rel (%p280) target = $region52
      $region51: #{tpu_custom_call.1} parent=47 // pred_region
        %p283 = scmp.lt.s32.totalorder %s18, 1
        %s284 = scalar_select %p283, %s18, 1
        %s285 = smul.addr %s284, 8
        %s286 = scalar_lea.vmem %s5, %s285
      $region52: #{tpu_custom_call.1} parent=47 // pred_fallthru
        _
    $region48: #{tpu_custom_call.1} parent=5 // pred_fallthru
      _
  $region6: #{tpu_custom_call.1} parent=0 // loop_footer
    %s16 = sadd.s32 1, %s12
  $region7: #{tpu_custom_call.1} parent=0 // loop_footer_branch
    %11 = sbr.rel target = $region3
  $region8: #{tpu_custom_call.1} parent=0 // loop_exit
    _

</llo_original>
